<compile_context>
chip_gen: v7x
topology: tpu7x:2x2x1
jax: 0.10.0
libtpu: 0.0.40
codegen_flags: <defaults>
</compile_context>

<pallas_src>
import jax
import jax.numpy as jnp
from jax.experimental import pallas as pl
from jax.experimental.pallas import tpu as pltpu


# -----------------------------------------------------------------------------
# Pallas kernel: lin1(folded bn1) -> relu -> lin2(folded bn2) -> relu -> lin3(folded bn3)
# -----------------------------------------------------------------------------
def _mlp_kernel(x_ref,            # (TB, D)    bf16
                w1_ref, b1_ref,   # (D, H1p)   bf16, (1, H1p) f32
                w2_ref, b2_ref,   # (H1p, H2p) bf16, (1, H2p) f32
                w3_ref, b3_ref,   # (H2p, C)   f32,  (1, C)   f32
                out_ref):         # (TB, C)    f32
    h1 = jnp.dot(x_ref[...], w1_ref[...], preferred_element_type=jnp.float32) + b1_ref[...]
    h1 = jnp.maximum(h1, 0.0).astype(jnp.bfloat16)
    h2 = jnp.dot(h1, w2_ref[...], preferred_element_type=jnp.float32) + b2_ref[...]
    h2 = jnp.maximum(h2, 0.0)
    out = jnp.dot(h2, w3_ref[...], preferred_element_type=jnp.float32) + b3_ref[...]
    out_ref[...] = out.astype(out_ref.dtype)


def _bn_fold(gamma, beta, mean, var, eps=1e-5):
    """Fold eval-mode BatchNorm1d into per-feature scale/shift."""
    inv = gamma / jnp.sqrt(var + eps)
    return inv, beta - mean * inv


def _round_up(n, m):
    return ((n + m - 1) // m) * m


def _pad2d(a, r, c, dtype=jnp.float32):
    return jnp.zeros((r, c), dtype).at[: a.shape[0], : a.shape[1]].set(a.astype(dtype))


def product_recommendation_forward(x_cat, x_cont, params):
    """Forward pass matching the PyTorch module in eval mode."""
    # ---- fold BatchNorms into the adjacent Linear layers (f32 math) ----------
    w1, b1 = params["lin1"]   # (D, 300), (300,)
    w2, b2 = params["lin2"]   # (300, 100), (100,)
    w3, b3 = params["lin3"]   # (100, C), (C,)

    n_emb = sum(t.shape[1] for t in params["emb_tables"])
    n_cont = x_cont.shape[1]

    # bn1 acts only on the continuous columns, and precedes lin1 linearly.
    s1, sh1 = _bn_fold(*params["bn1"])
    s0 = jnp.concatenate([jnp.ones((n_emb,), jnp.float32), s1])
    sh0 = jnp.concatenate([jnp.zeros((n_emb,), jnp.float32), sh1])
    w1f = s0[:, None] * w1.astype(jnp.float32)
    b1f = sh0 @ w1.astype(jnp.float32) + b1

    # bn2 sits between relu(lin1) and lin2 -> fold into lin2's input side.
    s2, sh2 = _bn_fold(*params["bn2"])
    w2f = s2[:, None] * w2.astype(jnp.float32)
    b2f = sh2 @ w2.astype(jnp.float32) + b2

    # bn3 sits between relu(lin2) and lin3 -> fold into lin3's input side.
    s3, sh3 = _bn_fold(*params["bn3"])
    w3f = s3[:, None] * w3.astype(jnp.float32)
    b3f = sh3 @ w3.astype(jnp.float32) + b3

    B = x_cat.shape[0]
    D = n_emb + n_cont
    H1, H2, C = w1.shape[1], w2.shape[1], w3.shape[1]

    # Hidden dims padded to lane multiples (cheap, weights only); D and C stay true-sized.
    H1p = _round_up(H1, 128)
    H2p = _round_up(H2, 128)

    # lin1/lin2 weights in bf16 (DMA + MXU win); lin3 weights and all biases in f32.
    w1p = _pad2d(w1f, D, H1p, jnp.bfloat16)
    b1p = _pad2d(b1f.reshape(1, -1), 1, H1p)
    w2p = _pad2d(w2f, H1p, H2p, jnp.bfloat16)
    b2p = _pad2d(b2f.reshape(1, -1), 1, H2p)
    w3p = _pad2d(w3f, H2p, C)
    b3p = b3f.reshape(1, -1).astype(jnp.float32)

    # ---- batch tiling ---------------------------------------------------------
    ALIGN = 16          # bf16 sublane packing
    TARGET_TB = 2048    # big tiles amortize the ~0.35 us per-grid-step cost
    B_al = _round_up(B, ALIGN)
    if B_al > TARGET_TB:
        nt = 2 * pl.cdiv(B_al, 2 * TARGET_TB)   # even #tiles -> both v7x TCs busy
    elif B_al >= 256:
        nt = 2                                   # enough work: still give v7x 2 steps
    else:
        nt = 1
    TB = _round_up(pl.cdiv(B_al, nt), ALIGN)
    Bp = nt * TB                                 # only a few rows of padding, never a full tile

    # ---- glue (plain JAX): single concat of embedding gathers + x_cont -------
    parts = [tbl[x_cat[:, i]] for i, tbl in enumerate(params["emb_tables"])] + [x_cont]
    x_in = jnp.concatenate([p.astype(jnp.bfloat16) for p in parts], axis=1)   # (B, D)
    if Bp != B:
        x_in = jnp.pad(x_in, ((0, Bp - B), (0, 0)))

    const = lambda shape: pl.BlockSpec(shape, lambda i: (0, 0))
    cost = pl.CostEstimate(
        flops=2 * Bp * (D * H1p + H1p * H2p + H2p * C),
        transcendentals=0,
        bytes_accessed=(2 * (Bp * D + D * H1p + H1p * H2p)
                        + 4 * (H2p * C + H1p + H2p + C + Bp * C)),
    )

    out_pad = pl.pallas_call(
        _mlp_kernel,
        out_shape=jax.ShapeDtypeStruct((Bp, C), jnp.float32),
        grid=(nt,),
        in_specs=[
            pl.BlockSpec((TB, D), lambda i: (i, 0)),     # x tile marches over batch
            const((D, H1p)), const((1, H1p)),            # weights stay VMEM-resident
            const((H1p, H2p)), const((1, H2p)),
            const((H2p, C)), const((1, C)),
        ],
        out_specs=pl.BlockSpec((TB, C), lambda i: (i, 0)),   # true-width (lane-masked) store
        compiler_params=pltpu.CompilerParams(
            dimension_semantics=("parallel",)),
        cost_estimate=cost,
    )(x_in, w1p, b1p, w2p, b2p, w3p, b3p)

    return out_pad[:B] if Bp != B else out_pad


def _reference_forward(x_cat, x_cont, params):
    """Pure-JAX f32 reference (eval mode) for correctness checking."""
    embs = [tbl[x_cat[:, i]] for i, tbl in enumerate(params["emb_tables"])]
    x = jnp.concatenate(embs, axis=1)
    s1, sh1 = _bn_fold(*params["bn1"])
    x2 = x_cont * s1 + sh1
    x = jnp.concatenate([x, x2], axis=1)
    w1, b1 = params["lin1"]
    w2, b2 = params["lin2"]
    w3, b3 = params["lin3"]
    s2, sh2 = _bn_fold(*params["bn2"])
    s3, sh3 = _bn_fold(*params["bn3"])
    x = jnp.maximum(x @ w1 + b1, 0.0)
    x = x * s2 + sh2
    x = jnp.maximum(x @ w2 + b2, 0.0)
    x = x * s3 + sh3
    return x @ w3 + b3


def init_params(key, embedding_sizes, n_cont, n_classes=3):
    ks = jax.random.split(key, 16)
    emb_tables = [
        0.1 * jax.random.normal(ks[i], (cat, dim), jnp.float32)
        for i, (cat, dim) in enumerate(embedding_sizes)
    ]
    n_emb = sum(dim for _, dim in embedding_sizes)
    d_in = n_emb + n_cont

    def linear(k, fin, fout):
        kw, kb = jax.random.split(k)
        bound = 1.0 / jnp.sqrt(fin)
        w = jax.random.uniform(kw, (fin, fout), jnp.float32, -bound, bound)
        b = jax.random.uniform(kb, (fout,), jnp.float32, -bound, bound)
        return w, b

    def bn(k, f):
        k1, k2, k3, k4 = jax.random.split(k, 4)
        gamma = 1.0 + 0.1 * jax.random.normal(k1, (f,), jnp.float32)
        beta = 0.1 * jax.random.normal(k2, (f,), jnp.float32)
        mean = 0.1 * jax.random.normal(k3, (f,), jnp.float32)
        var = 1.0 + 0.1 * jax.random.uniform(k4, (f,), jnp.float32)
        return gamma, beta, mean, var

    return {
        "emb_tables": emb_tables,
        "lin1": linear(ks[8], d_in, 300),
        "lin2": linear(ks[9], 300, 100),
        "lin3": linear(ks[10], 100, n_classes),
        "bn1": bn(ks[11], n_cont),
        "bn2": bn(ks[12], 300),
        "bn3": bn(ks[13], 100),
    }


if __name__ == "__main__":
    key = jax.random.PRNGKey(0)
    embedding_sizes = [(10, 6), (8, 4), (5, 2)]   # n_emb = 12
    n_cont = 4
    n_classes = 3
    batch = 8

    params = init_params(key, embedding_sizes, n_cont, n_classes)

    k_cat, k_cont = jax.random.split(jax.random.PRNGKey(0), 2)
    maxes = jnp.array([c for c, _ in embedding_sizes], jnp.int32)
    x_cat = jax.random.randint(k_cat, (batch, len(embedding_sizes)), 0, 5).astype(jnp.int32) % maxes
    x_cont = jax.random.normal(k_cont, (batch, n_cont), jnp.float32)

    fwd = jax.jit(product_recommendation_forward)
    out = fwd(x_cat, x_cont, params)
    out = jax.block_until_ready(out)

    ref = _reference_forward(x_cat, x_cont, params)
    assert out.shape == (batch, n_classes)
    # bf16 activations / lin1-lin2 weights => looser tolerance than pure-f32.
    assert jnp.allclose(out, ref, atol=5e-2, rtol=5e-2), "mismatch vs reference"

    print("KERNEL_OK")
</pallas_src>

<mosaic_0001>
module attributes {stable_mosaic.version = 11 : i64} {
  func.func @_mlp_kernel(%arg0: i32, %arg1: memref<16x16xbf16, #tpu.memory_space<vmem>>, %arg2: memref<16x384xbf16, #tpu.memory_space<vmem>>, %arg3: memref<1x384xf32, #tpu.memory_space<vmem>>, %arg4: memref<384x128xbf16, #tpu.memory_space<vmem>>, %arg5: memref<1x128xf32, #tpu.memory_space<vmem>>, %arg6: memref<128x3xf32, #tpu.memory_space<vmem>>, %arg7: memref<1x3xf32, #tpu.memory_space<vmem>>, %arg8: memref<16x3xf32, #tpu.memory_space<vmem>>) attributes {dimension_semantics = [#tpu.dimension_semantics<parallel>], iteration_bounds = array<i64: 1>, scalar_prefetch = 0 : i64, scratch_operands = 0 : i64, tpu.core_type = #tpu.core_type<tc>, window_params = [{transform_indices = @transform_0, window_bounds = array<i64: 16, 16>}, {pipeline_mode = #tpu.pipeline_mode<synchronous>, transform_indices = @transform_1, window_bounds = array<i64: 16, 384>}, {pipeline_mode = #tpu.pipeline_mode<synchronous>, transform_indices = @transform_2, window_bounds = array<i64: 1, 384>}, {pipeline_mode = #tpu.pipeline_mode<synchronous>, transform_indices = @transform_3, window_bounds = array<i64: 384, 128>}, {pipeline_mode = #tpu.pipeline_mode<synchronous>, transform_indices = @transform_4, window_bounds = array<i64: 1, 128>}, {pipeline_mode = #tpu.pipeline_mode<synchronous>, transform_indices = @transform_5, window_bounds = array<i64: 128, 3>}, {pipeline_mode = #tpu.pipeline_mode<synchronous>, transform_indices = @transform_6, window_bounds = array<i64: 1, 3>}, {transform_indices = @transform_7, window_bounds = array<i64: 16, 3>}]} {
    %c0 = arith.constant 0 : index
    %c0_0 = arith.constant 0 : index
    %0 = vector.load %arg1[%c0, %c0_0] : memref<16x16xbf16, #tpu.memory_space<vmem>>, vector<16x16xbf16>
    %c0_1 = arith.constant 0 : index
    %c0_2 = arith.constant 0 : index
    %1 = vector.load %arg2[%c0_1, %c0_2] : memref<16x384xbf16, #tpu.memory_space<vmem>>, vector<16x384xbf16>
    %cst = arith.constant dense<0.000000e+00> : vector<16x384xf32>
    %2 = tpu.matmul %0, %1, %cst {dimension_numbers = #tpu.dot_dimension_numbers<[1], [0], [0], [1], [0, 0, 1, 1], [], []>} : vector<16x16xbf16>, vector<16x384xbf16>, vector<16x384xf32> -> vector<16x384xf32>
    %c0_3 = arith.constant 0 : index
    %c0_4 = arith.constant 0 : index
    %3 = vector.load %arg3[%c0_3, %c0_4] : memref<1x384xf32, #tpu.memory_space<vmem>>, vector<1x384xf32>
    %4 = vector.broadcast %3 : vector<1x384xf32> to vector<16x384xf32>
    %5 = arith.addf %2, %4 : vector<16x384xf32>
    %cst_5 = arith.constant 0.000000e+00 : f32
    %6 = vector.broadcast %cst_5 : f32 to vector<16x384xf32>
    %7 = arith.maximumf %5, %6 : vector<16x384xf32>
    %8 = arith.truncf %7 : vector<16x384xf32> to vector<16x384xbf16>
    %c0_6 = arith.constant 0 : index
    %c0_7 = arith.constant 0 : index
    %9 = vector.load %arg4[%c0_6, %c0_7] : memref<384x128xbf16, #tpu.memory_space<vmem>>, vector<384x128xbf16>
    %cst_8 = arith.constant dense<0.000000e+00> : vector<16x128xf32>
    %10 = tpu.matmul %8, %9, %cst_8 {dimension_numbers = #tpu.dot_dimension_numbers<[1], [0], [0], [1], [0, 0, 1, 1], [], []>} : vector<16x384xbf16>, vector<384x128xbf16>, vector<16x128xf32> -> vector<16x128xf32>
    %c0_9 = arith.constant 0 : index
    %c0_10 = arith.constant 0 : index
    %11 = vector.load %arg5[%c0_9, %c0_10] : memref<1x128xf32, #tpu.memory_space<vmem>>, vector<1x128xf32>
    %12 = vector.broadcast %11 : vector<1x128xf32> to vector<16x128xf32>
    %13 = arith.addf %10, %12 : vector<16x128xf32>
    %cst_11 = arith.constant 0.000000e+00 : f32
    %14 = vector.broadcast %cst_11 : f32 to vector<16x128xf32>
    %15 = arith.maximumf %13, %14 : vector<16x128xf32>
    %c0_12 = arith.constant 0 : index
    %c0_13 = arith.constant 0 : index
    %16 = vector.load %arg6[%c0_12, %c0_13] : memref<128x3xf32, #tpu.memory_space<vmem>>, vector<128x3xf32>
    %cst_14 = arith.constant dense<0.000000e+00> : vector<16x3xf32>
    %17 = tpu.matmul %15, %16, %cst_14 {dimension_numbers = #tpu.dot_dimension_numbers<[1], [0], [0], [1], [0, 0, 1, 1], [], []>} : vector<16x128xf32>, vector<128x3xf32>, vector<16x3xf32> -> vector<16x3xf32>
    %c0_15 = arith.constant 0 : index
    %c0_16 = arith.constant 0 : index
    %18 = vector.load %arg7[%c0_15, %c0_16] : memref<1x3xf32, #tpu.memory_space<vmem>>, vector<1x3xf32>
    %19 = vector.broadcast %18 : vector<1x3xf32> to vector<16x3xf32>
    %20 = arith.addf %17, %19 : vector<16x3xf32>
    %c0_17 = arith.constant 0 : index
    %c0_18 = arith.constant 0 : index
    %21 = vector.load %arg8[%c0_17, %c0_18] : memref<16x3xf32, #tpu.memory_space<vmem>>, vector<16x3xf32>
    tpu.vector_store %arg8[%c0_17, %c0_18], %20 {strides = array<i32>} : memref<16x3xf32, #tpu.memory_space<vmem>>, vector<16x3xf32>,
    return
  }
  func.func @transform_0(%arg0: i32) -> (i32, i32) {
    %c0_i32 = arith.constant 0 : i32
    %c0_i32_0 = arith.constant 0 : i32
    return %arg0, %c0_i32 : i32, i32
  }
  func.func @transform_1(%arg0: i32) -> (i32, i32) {
    %c0_i32 = arith.constant 0 : i32
    %c0_i32_0 = arith.constant 0 : i32
    %c0_i32_1 = arith.constant 0 : i32
    return %c0_i32, %c0_i32_0 : i32, i32
  }
  func.func @transform_2(%arg0: i32) -> (i32, i32) {
    %c0_i32 = arith.constant 0 : i32
    %c0_i32_0 = arith.constant 0 : i32
    %c0_i32_1 = arith.constant 0 : i32
    return %c0_i32, %c0_i32_0 : i32, i32
  }
  func.func @transform_3(%arg0: i32) -> (i32, i32) {
    %c0_i32 = arith.constant 0 : i32
    %c0_i32_0 = arith.constant 0 : i32
    %c0_i32_1 = arith.constant 0 : i32
    return %c0_i32, %c0_i32_0 : i32, i32
  }
  func.func @transform_4(%arg0: i32) -> (i32, i32) {
    %c0_i32 = arith.constant 0 : i32
    %c0_i32_0 = arith.constant 0 : i32
    %c0_i32_1 = arith.constant 0 : i32
    return %c0_i32, %c0_i32_0 : i32, i32
  }
  func.func @transform_5(%arg0: i32) -> (i32, i32) {
    %c0_i32 = arith.constant 0 : i32
    %c0_i32_0 = arith.constant 0 : i32
    %c0_i32_1 = arith.constant 0 : i32
    return %c0_i32, %c0_i32_0 : i32, i32
  }
  func.func @transform_6(%arg0: i32) -> (i32, i32) {
    %c0_i32 = arith.constant 0 : i32
    %c0_i32_0 = arith.constant 0 : i32
    %c0_i32_1 = arith.constant 0 : i32
    return %c0_i32, %c0_i32_0 : i32, i32
  }
  func.func @transform_7(%arg0: i32) -> (i32, i32) {
    %c0_i32 = arith.constant 0 : i32
    %c0_i32_0 = arith.constant 0 : i32
    return %arg0, %c0_i32 : i32, i32
  }
}

</mosaic_0001>

<llo_original>
// kernel: product_recommendation_forward.1
$region0: #{product_recommendation_forward.1}
  #allocation0 [shape = 'u32[]', space=smem, size = 0x4, offset = 0x4, fixed_abs, tag = 'smem constant byte address 0x4 - core index']
  #allocation1 [shape = 'u32[144,128]{1,0:T(1,128)}', space=vmem, size = 0x12000, scoped, tag = 'internal scratch']
  %s0 = inlined_call_operand.vmem [shape: bf16[16,16], index: 0, kind: input, shape index: {}]
  %s1 = inlined_call_operand.vmem [shape: bf16[16,384], index: 1, kind: input, shape index: {}]
  %s2 = inlined_call_operand.vmem [shape: f32[1,384], index: 2, kind: input, shape index: {}]
  %s3 = inlined_call_operand.vmem [shape: bf16[384,128], index: 3, kind: input, shape index: {}]
  %s4 = inlined_call_operand.vmem [shape: f32[1,128], index: 4, kind: input, shape index: {}]
  %s5 = inlined_call_operand.vmem [shape: f32[128,3], index: 5, kind: input, shape index: {}]
  %s6 = inlined_call_operand.vmem [shape: f32[1,3], index: 6, kind: input, shape index: {}]
  %s7 = inlined_call_operand.vmem [shape: f32[16,3], index: 7, kind: output, shape index: {}]
  %s8 = sld [smem:[#allocation0]]
  $region38: #{product_recommendation_forward.1} parent=0
    _
  %s10 = ssub.s32 1, %s8
  %s11 = scalar_select 0, %s10, %s8
  // Predicated region
  $region2: #{product_recommendation_forward.1} parent=0 // pred_check
    _
  $region3: #{product_recommendation_forward.1} parent=0 // pred_check_branch
    %13 = sbr.rel (0) target = $region5
  $region4: #{product_recommendation_forward.1} parent=0 // pred_region
    _
  $region5: #{product_recommendation_forward.1} parent=0 // pred_fallthru
    _
  // Predicated region
  $region6: #{product_recommendation_forward.1} parent=0 // pred_check
    _
  $region7: #{product_recommendation_forward.1} parent=0 // pred_check_branch
    %15 = sbr.rel (0) target = $region9
  $region8: #{product_recommendation_forward.1} parent=0 // pred_region
    _
  $region9: #{product_recommendation_forward.1} parent=0 // pred_fallthru
    _
  // Predicated region
  $region10: #{product_recommendation_forward.1} parent=0 // pred_check
    _
  $region11: #{product_recommendation_forward.1} parent=0 // pred_check_branch
    %17 = sbr.rel (0) target = $region13
  $region12: #{product_recommendation_forward.1} parent=0 // pred_region
    _
  $region13: #{product_recommendation_forward.1} parent=0 // pred_fallthru
    _
  // Predicated region
  $region14: #{product_recommendation_forward.1} parent=0 // pred_check
    _
  $region15: #{product_recommendation_forward.1} parent=0 // pred_check_branch
    %19 = sbr.rel (0) target = $region17
  $region16: #{product_recommendation_forward.1} parent=0 // pred_region
    _
  $region17: #{product_recommendation_forward.1} parent=0 // pred_fallthru
    _
  // Predicated region
  $region18: #{product_recommendation_forward.1} parent=0 // pred_check
    _
  $region19: #{product_recommendation_forward.1} parent=0 // pred_check_branch
    %21 = sbr.rel (0) target = $region21
  $region20: #{product_recommendation_forward.1} parent=0 // pred_region
    _
  $region21: #{product_recommendation_forward.1} parent=0 // pred_fallthru
    _
  // Predicated region
  $region22: #{product_recommendation_forward.1} parent=0 // pred_check
    _
  $region23: #{product_recommendation_forward.1} parent=0 // pred_check_branch
    %23 = sbr.rel (0) target = $region25
  $region24: #{product_recommendation_forward.1} parent=0 // pred_region
    _
  $region25: #{product_recommendation_forward.1} parent=0 // pred_fallthru
    _
  // Predicated region
  $region26: #{product_recommendation_forward.1} parent=0 // pred_check
    _
  $region27: #{product_recommendation_forward.1} parent=0 // pred_check_branch
    %25 = sbr.rel (0) target = $region29
  $region28: #{product_recommendation_forward.1} parent=0 // pred_region
    _
  $region29: #{product_recommendation_forward.1} parent=0 // pred_fallthru
    _
  %v27 = vld [vmem:[%s0] sm:$0xf]
  %v28 = vld [vmem:[%s0 + $0x4] sm:$0xf]
  %v29 = vld [vmem:[%s1] sm:$0xff]
  %v30 = vld [vmem:[%s1 + $0x8] sm:$0xf]
  %v31 = vld [vmem:[%s1 + $0xc] sm:$0xff]
  %v32 = vld [vmem:[%s1 + $0x14] sm:$0xf]
  %v33 = vld [vmem:[%s2] sm:$0x7]
  %v35 = vlaneseq
  %v36 = vshrl.u32 %v35, 7
  %v37 = vsub.s32 0, %v36
  %v38 = vrot.slane %v33, %v37
  %v39 = vlaneseq
  %v40 = vshrl.u32 %v39, 7
  %v41 = vsub.s32 1, %v40
  %v42 = vrot.slane %v33, %v41
  %v43 = vlaneseq
  %v44 = vshrl.u32 %v43, 7
  %v45 = vsub.s32 2, %v44
  %v46 = vrot.slane %v33, %v45
  %v52 = vunpack.c.l.b16 %v27
  %v53 = vunpack.c.l.b16 %v28
  %v54 = vpack.c.b16 %v53, %v52
  %v59 = vunpack.c.l.b16 %v29
  %v60 = vunpack.c.h.b16 %v29
  %v61 = vunpack.c.l.b16 %v30
  %v62 = vunpack.c.l.b16 %v31
  %v63 = vunpack.c.h.b16 %v31
  %v64 = vunpack.c.l.b16 %v32
  %v65 = vpack.c.b16 %v62, %v59
  %v66 = vpack.c.b16 %v63, %v60
  %v67 = vpack.c.b16 %v64, %v61
  %vm71 = vcmask 130048
  %v73 = vsel %vm71, %v54, 0
  %75 = vmatprep.subr.bf16.mxu0 %v66
  %76 = vmatpush1.bf16.msra.mxu0 %v65
  %77 = vmatprep.subr.bf16.mxu0 0
  %78 = vmatpush1.bf16.msra.mxu0 0
  %79 = vmatprep.subr.bf16.mxu0 0
  %80 = vmatpush1.bf16.msra.mxu0 0
  %81 = vmatprep.subr.bf16.mxu0 0
  %82 = vmatpush1.bf16.msra.mxu0 0
  %83 = vmatprep.subr.bf16.mxu0 0
  %84 = vmatpush1.bf16.msra.mxu0 0
  %85 = vmatprep.subr.bf16.mxu0 0
  %86 = vmatpush1.bf16.msra.mxu0 0
  %87 = vmatprep.subr.bf16.mxu0 0
  %88 = vmatpush1.bf16.msra.mxu0 0
  %89 = vmatprep.subr.bf16.mxu0 0
  %90 = vmatpush1.bf16.msra.mxu0 0
  %91 = vmatprep.subr.bf16.mxu0 0
  %92 = vmatpush1.bf16.msra.mxu0 0
  %93 = vmatprep.subr.bf16.mxu0 0
  %94 = vmatpush1.bf16.msra.mxu0 0
  %95 = vmatprep.subr.bf16.mxu0 0
  %96 = vmatpush1.bf16.msra.mxu0 0
  %97 = vmatprep.subr.bf16.mxu0 0
  %98 = vmatpush1.bf16.msra.mxu0 0
  %99 = vmatprep.subr.bf16.mxu0 0
  %100 = vmatpush1.bf16.msra.mxu0 0
  %101 = vmatprep.subr.bf16.mxu0 0
  %102 = vmatpush1.bf16.msra.mxu0 0
  %103 = vmatprep.subr.bf16.mxu0 0
  %104 = vmatpush1.bf16.msra.mxu0 0
  %105 = vmatprep.subr.bf16.mxu0 0
  %106 = vmatpush1.bf16.msra.mxu0 0
  %107 = vmatprep.mubr.bf16.mxu0 0
  %108 = vmatmul.mubr.bf16.gmra.mrb[0].mxu0 %v73
  %v109 = vpop.f32.mrb[0].mxu0
  %v110 = vadd.f32 %v38, %v109
  %v111 = vpop.f32.mrb[0].mxu0
  %v112 = vadd.f32 %v42, %v111
  %v113 = vpop.f32.mrb[0].mxu0
  %v114 = vadd.f32 %v38, %v113
  %v115 = vpop.f32.mrb[0].mxu0
  %v116 = vadd.f32 %v42, %v115
  %117 = vdwg.mxu0
  %118 = vmatprep.subr.bf16.mxu0 0
  %119 = vmatpush1.bf16.msra.mxu0 %v67
  %120 = vmatprep.subr.bf16.mxu0 0
  %121 = vmatpush1.bf16.msra.mxu0 0
  %122 = vmatprep.subr.bf16.mxu0 0
  %123 = vmatpush1.bf16.msra.mxu0 0
  %124 = vmatprep.subr.bf16.mxu0 0
  %125 = vmatpush1.bf16.msra.mxu0 0
  %126 = vmatprep.subr.bf16.mxu0 0
  %127 = vmatpush1.bf16.msra.mxu0 0
  %128 = vmatprep.subr.bf16.mxu0 0
  %129 = vmatpush1.bf16.msra.mxu0 0
  %130 = vmatprep.subr.bf16.mxu0 0
  %131 = vmatpush1.bf16.msra.mxu0 0
  %132 = vmatprep.subr.bf16.mxu0 0
  %133 = vmatpush1.bf16.msra.mxu0 0
  %134 = vmatprep.subr.bf16.mxu0 0
  %135 = vmatpush1.bf16.msra.mxu0 0
  %136 = vmatprep.subr.bf16.mxu0 0
  %137 = vmatpush1.bf16.msra.mxu0 0
  %138 = vmatprep.subr.bf16.mxu0 0
  %139 = vmatpush1.bf16.msra.mxu0 0
  %140 = vmatprep.subr.bf16.mxu0 0
  %141 = vmatpush1.bf16.msra.mxu0 0
  %142 = vmatprep.subr.bf16.mxu0 0
  %143 = vmatpush1.bf16.msra.mxu0 0
  %144 = vmatprep.subr.bf16.mxu0 0
  %145 = vmatpush1.bf16.msra.mxu0 0
  %146 = vmatprep.subr.bf16.mxu0 0
  %147 = vmatpush1.bf16.msra.mxu0 0
  %148 = vmatprep.subr.bf16.mxu0 0
  %149 = vmatpush1.bf16.msra.mxu0 0
  %150 = vmatprep.mubr.bf16.mxu0 0
  %151 = vmatmul.mubr.bf16.gmra.mrb[0].mxu0 %v73
  %v152 = vpop.f32.mrb[0].mxu0
  %v153 = vadd.f32 %v46, %v152
  %v154 = vpop.f32.mrb[0].mxu0
  %v155 = vpop.f32.mrb[0].mxu0
  %v156 = vadd.f32 %v46, %v155
  %v157 = vpop.f32.mrb[0].mxu0
  %158 = vdwg.mxu0
  %v159 = vmax.f32 %v110, 0.0
  %v160 = vmax.f32 %v112, 0.0
  %v161 = vmax.f32 %v153, 0.0
  %v162 = vmax.f32 %v114, 0.0
  %v163 = vmax.f32 %v116, 0.0
  %v164 = vmax.f32 %v156, 0.0
  %v165 = vpack.c.bf16 %v162, %v159
  %v166 = vpack.c.bf16 %v163, %v160
  %v167 = vpack.c.bf16 %v164, %v161
  %v168 = vld [vmem:[%s3] sm:$0xf]
  %v169 = vld [vmem:[%s3 + $0x4] sm:$0xf]
  %v170 = vld [vmem:[%s3 + $0x8] sm:$0xf]
  %v171 = vld [vmem:[%s3 + $0xc] sm:$0xf]
  %v172 = vld [vmem:[%s3 + $0x10] sm:$0xf]
  %v173 = vld [vmem:[%s3 + $0x14] sm:$0xf]
  %v174 = vld [vmem:[%s3 + $0x18] sm:$0xf]
  %v175 = vld [vmem:[%s3 + $0x1c] sm:$0xf]
  %v176 = vld [vmem:[%s3 + $0x20] sm:$0xf]
  %v177 = vld [vmem:[%s3 + $0x24] sm:$0xf]
  %v178 = vld [vmem:[%s3 + $0x28] sm:$0xf]
  %v179 = vld [vmem:[%s3 + $0x2c] sm:$0xf]
  %v180 = vld [vmem:[%s3 + $0x30] sm:$0xf]
  %v181 = vld [vmem:[%s3 + $0x34] sm:$0xf]
  %v182 = vld [vmem:[%s3 + $0x38] sm:$0xf]
  %v183 = vld [vmem:[%s3 + $0x3c] sm:$0xf]
  %v184 = vld [vmem:[%s3 + $0x40] sm:$0xf]
  %v185 = vld [vmem:[%s3 + $0x44] sm:$0xf]
  %v186 = vld [vmem:[%s3 + $0x48] sm:$0xf]
  %v187 = vld [vmem:[%s3 + $0x4c] sm:$0xf]
  %v188 = vld [vmem:[%s3 + $0x50] sm:$0xf]
  %v189 = vld [vmem:[%s3 + $0x54] sm:$0xf]
  %v190 = vld [vmem:[%s3 + $0x58] sm:$0xf]
  %v191 = vld [vmem:[%s3 + $0x5c] sm:$0xf]
  %v192 = vld [vmem:[%s3 + $0x60] sm:$0xf]
  %v193 = vld [vmem:[%s3 + $0x64] sm:$0xf]
  %v194 = vld [vmem:[%s3 + $0x68] sm:$0xf]
  %v195 = vld [vmem:[%s3 + $0x6c] sm:$0xf]
  %v196 = vld [vmem:[%s3 + $0x70] sm:$0xf]
  %v197 = vld [vmem:[%s3 + $0x74] sm:$0xf]
  %v198 = vld [vmem:[%s3 + $0x78] sm:$0xf]
  %v199 = vld [vmem:[%s3 + $0x7c] sm:$0xf]
  %v200 = vld [vmem:[%s3 + $0x80] sm:$0xf]
  %v201 = vld [vmem:[%s3 + $0x84] sm:$0xf]
  %v202 = vld [vmem:[%s3 + $0x88] sm:$0xf]
  %v203 = vld [vmem:[%s3 + $0x8c] sm:$0xf]
  %v204 = vld [vmem:[%s3 + $0x90] sm:$0xf]
  %v205 = vld [vmem:[%s3 + $0x94] sm:$0xf]
  %v206 = vld [vmem:[%s3 + $0x98] sm:$0xf]
  %v207 = vld [vmem:[%s3 + $0x9c] sm:$0xf]
  %v208 = vld [vmem:[%s3 + $0xa0] sm:$0xf]
  %v209 = vld [vmem:[%s3 + $0xa4] sm:$0xf]
  %v210 = vld [vmem:[%s3 + $0xa8] sm:$0xf]
  %v211 = vld [vmem:[%s3 + $0xac] sm:$0xf]
  %v212 = vld [vmem:[%s3 + $0xb0] sm:$0xf]
  %v213 = vld [vmem:[%s3 + $0xb4] sm:$0xf]
  %v214 = vld [vmem:[%s3 + $0xb8] sm:$0xf]
  %v215 = vld [vmem:[%s3 + $0xbc] sm:$0xf]
  %v216 = vld [vmem:[%s4] sm:$0x1]
  %v218 = vlaneseq
  %v219 = vshrl.u32 %v218, 7
  %v220 = vsub.s32 0, %v219
  %v221 = vrot.slane %v216, %v220
  %v271 = vunpack.c.l.b16 %v168
  %v272 = vunpack.c.l.b16 %v169
  %v273 = vunpack.c.l.b16 %v170
  %v274 = vunpack.c.l.b16 %v171
  %v275 = vunpack.c.l.b16 %v172
  %v276 = vunpack.c.l.b16 %v173
  %v277 = vunpack.c.l.b16 %v174
  %v278 = vunpack.c.l.b16 %v175
  %v279 = vunpack.c.l.b16 %v176
  %v280 = vunpack.c.l.b16 %v177
  %v281 = vunpack.c.l.b16 %v178
  %v282 = vunpack.c.l.b16 %v179
  %v283 = vunpack.c.l.b16 %v180
  %v284 = vunpack.c.l.b16 %v181
  %v285 = vunpack.c.l.b16 %v182
  %v286 = vunpack.c.l.b16 %v183
  %v287 = vunpack.c.l.b16 %v184
  %v288 = vunpack.c.l.b16 %v185
  %v289 = vunpack.c.l.b16 %v186
  %v290 = vunpack.c.l.b16 %v187
  %v291 = vunpack.c.l.b16 %v188
  %v292 = vunpack.c.l.b16 %v189
  %v293 = vunpack.c.l.b16 %v190
  %v294 = vunpack.c.l.b16 %v191
  %v295 = vunpack.c.l.b16 %v192
  %v296 = vunpack.c.l.b16 %v193
  %v297 = vunpack.c.l.b16 %v194
  %v298 = vunpack.c.l.b16 %v195
  %v299 = vunpack.c.l.b16 %v196
  %v300 = vunpack.c.l.b16 %v197
  %v301 = vunpack.c.l.b16 %v198
  %v302 = vunpack.c.l.b16 %v199
  %v303 = vunpack.c.l.b16 %v200
  %v304 = vunpack.c.l.b16 %v201
  %v305 = vunpack.c.l.b16 %v202
  %v306 = vunpack.c.l.b16 %v203
  %v307 = vunpack.c.l.b16 %v204
  %v308 = vunpack.c.l.b16 %v205
  %v309 = vunpack.c.l.b16 %v206
  %v310 = vunpack.c.l.b16 %v207
  %v311 = vunpack.c.l.b16 %v208
  %v312 = vunpack.c.l.b16 %v209
  %v313 = vunpack.c.l.b16 %v210
  %v314 = vunpack.c.l.b16 %v211
  %v315 = vunpack.c.l.b16 %v212
  %v316 = vunpack.c.l.b16 %v213
  %v317 = vunpack.c.l.b16 %v214
  %v318 = vunpack.c.l.b16 %v215
  %v319 = vpack.c.b16 %v272, %v271
  %v320 = vpack.c.b16 %v274, %v273
  %v321 = vpack.c.b16 %v276, %v275
  %v322 = vpack.c.b16 %v278, %v277
  %v323 = vpack.c.b16 %v280, %v279
  %v324 = vpack.c.b16 %v282, %v281
  %v325 = vpack.c.b16 %v284, %v283
  %v326 = vpack.c.b16 %v286, %v285
  %v327 = vpack.c.b16 %v288, %v287
  %v328 = vpack.c.b16 %v290, %v289
  %v329 = vpack.c.b16 %v292, %v291
  %v330 = vpack.c.b16 %v294, %v293
  %v331 = vpack.c.b16 %v296, %v295
  %v332 = vpack.c.b16 %v298, %v297
  %v333 = vpack.c.b16 %v300, %v299
  %v334 = vpack.c.b16 %v302, %v301
  %v335 = vpack.c.b16 %v304, %v303
  %v336 = vpack.c.b16 %v306, %v305
  %v337 = vpack.c.b16 %v308, %v307
  %v338 = vpack.c.b16 %v310, %v309
  %v339 = vpack.c.b16 %v312, %v311
  %v340 = vpack.c.b16 %v314, %v313
  %v341 = vpack.c.b16 %v316, %v315
  %v342 = vpack.c.b16 %v318, %v317
  %367 = vmatprep.subr.bf16.mxu0 0
  %368 = vmatpush1.bf16.msra.mxu0 %v319
  %369 = vmatprep.subr.bf16.mxu0 0
  %370 = vmatpush1.bf16.msra.mxu0 %v320
  %371 = vmatprep.subr.bf16.mxu0 0
  %372 = vmatpush1.bf16.msra.mxu0 %v321
  %373 = vmatprep.subr.bf16.mxu0 0
  %374 = vmatpush1.bf16.msra.mxu0 %v322
  %375 = vmatprep.subr.bf16.mxu0 0
  %376 = vmatpush1.bf16.msra.mxu0 %v323
  %377 = vmatprep.subr.bf16.mxu0 0
  %378 = vmatpush1.bf16.msra.mxu0 %v324
  %379 = vmatprep.subr.bf16.mxu0 0
  %380 = vmatpush1.bf16.msra.mxu0 %v325
  %381 = vmatprep.subr.bf16.mxu0 0
  %382 = vmatpush1.bf16.msra.mxu0 %v326
  %383 = vmatprep.subr.bf16.mxu0 0
  %384 = vmatpush1.bf16.msra.mxu0 %v327
  %385 = vmatprep.subr.bf16.mxu0 0
  %386 = vmatpush1.bf16.msra.mxu0 %v328
  %387 = vmatprep.subr.bf16.mxu0 0
  %388 = vmatpush1.bf16.msra.mxu0 %v329
  %389 = vmatprep.subr.bf16.mxu0 0
  %390 = vmatpush1.bf16.msra.mxu0 %v330
  %391 = vmatprep.subr.bf16.mxu0 0
  %392 = vmatpush1.bf16.msra.mxu0 %v331
  %393 = vmatprep.subr.bf16.mxu0 0
  %394 = vmatpush1.bf16.msra.mxu0 %v332
  %395 = vmatprep.subr.bf16.mxu0 0
  %396 = vmatpush1.bf16.msra.mxu0 %v333
  %397 = vmatprep.subr.bf16.mxu0 0
  %398 = vmatpush1.bf16.msra.mxu0 %v334
  %399 = vmatprep.mubr.bf16.mxu0 %v166
  %400 = vmatmul.mubr.bf16.gmra.mrb[0].mxu0 %v165
  %v401 = vpop.f32.mrb[0].mxu0
  %v402 = vadd.f32 %v221, %v401
  %v403 = vpop.f32.mrb[0].mxu0
  %v404 = vpop.f32.mrb[0].mxu0
  %v405 = vadd.f32 %v221, %v404
  %v406 = vpop.f32.mrb[0].mxu0
  %407 = vdwg.mxu0
  %408 = vmatprep.subr.bf16.mxu0 0
  %409 = vmatpush1.bf16.msra.mxu0 %v335
  %410 = vmatprep.subr.bf16.mxu0 0
  %411 = vmatpush1.bf16.msra.mxu0 %v336
  %412 = vmatprep.subr.bf16.mxu0 0
  %413 = vmatpush1.bf16.msra.mxu0 %v337
  %414 = vmatprep.subr.bf16.mxu0 0
  %415 = vmatpush1.bf16.msra.mxu0 %v338
  %416 = vmatprep.subr.bf16.mxu0 0
  %417 = vmatpush1.bf16.msra.mxu0 %v339
  %418 = vmatprep.subr.bf16.mxu0 0
  %419 = vmatpush1.bf16.msra.mxu0 %v340
  %420 = vmatprep.subr.bf16.mxu0 0
  %421 = vmatpush1.bf16.msra.mxu0 %v341
  %422 = vmatprep.subr.bf16.mxu0 0
  %423 = vmatpush1.bf16.msra.mxu0 %v342
  %424 = vmatprep.subr.bf16.mxu0 0
  %425 = vmatpush1.bf16.msra.mxu0 0
  %426 = vmatprep.subr.bf16.mxu0 0
  %427 = vmatpush1.bf16.msra.mxu0 0
  %428 = vmatprep.subr.bf16.mxu0 0
  %429 = vmatpush1.bf16.msra.mxu0 0
  %430 = vmatprep.subr.bf16.mxu0 0
  %431 = vmatpush1.bf16.msra.mxu0 0
  %432 = vmatprep.subr.bf16.mxu0 0
  %433 = vmatpush1.bf16.msra.mxu0 0
  %434 = vmatprep.subr.bf16.mxu0 0
  %435 = vmatpush1.bf16.msra.mxu0 0
  %436 = vmatprep.subr.bf16.mxu0 0
  %437 = vmatpush1.bf16.msra.mxu0 0
  %438 = vmatprep.subr.bf16.mxu0 0
  %439 = vmatpush1.bf16.msra.mxu0 0
  %440 = vmatprep.mubr.bf16.mxu0 0
  %441 = vmatmul.mubr.bf16.gmra.mrb[0].mxu0 %v167
  %v442 = vpop.f32.mrb[0].mxu0
  %v443 = vadd.f32 %v402, %v442
  %v444 = vpop.f32.mrb[0].mxu0
  %v445 = vpop.f32.mrb[0].mxu0
  %v446 = vadd.f32 %v405, %v445
  %v447 = vpop.f32.mrb[0].mxu0
  %448 = vdwg.mxu0
  %v449 = vmax.f32 %v443, 0.0
  %v450 = vmax.f32 %v446, 0.0
  %v451 = vld [vmem:[%s5] sm:$0xff]
  %v452 = vld [vmem:[%s5 + $0x8] sm:$0xff]
  %v453 = vld [vmem:[%s5 + $0x10] sm:$0xff]
  %v454 = vld [vmem:[%s5 + $0x18] sm:$0xff]
  %v455 = vld [vmem:[%s5 + $0x20] sm:$0xff]
  %v456 = vld [vmem:[%s5 + $0x28] sm:$0xff]
  %v457 = vld [vmem:[%s5 + $0x30] sm:$0xff]
  %v458 = vld [vmem:[%s5 + $0x38] sm:$0xff]
  %v459 = vld [vmem:[%s5 + $0x40] sm:$0xff]
  %v460 = vld [vmem:[%s5 + $0x48] sm:$0xff]
  %v461 = vld [vmem:[%s5 + $0x50] sm:$0xff]
  %v462 = vld [vmem:[%s5 + $0x58] sm:$0xff]
  %v463 = vld [vmem:[%s5 + $0x60] sm:$0xff]
  %v464 = vld [vmem:[%s5 + $0x68] sm:$0xff]
  %v465 = vld [vmem:[%s5 + $0x70] sm:$0xff]
  %v466 = vld [vmem:[%s5 + $0x78] sm:$0xff]
  %v467 = vld [vmem:[%s6] sm:$0x1]
  %v469 = vlaneseq
  %v470 = vshrl.u32 %v469, 7
  %v471 = vsub.s32 0, %v470
  %v472 = vrot.slane %v467, %v471
  %474 = vmatprep.subr.mxu0 0.0
  %475 = vmatpush1.msra.mxu0 %v451
  %476 = vmatprep.subr.mxu0 0.0
  %477 = vmatpush1.msra.mxu0 %v452
  %478 = vmatprep.subr.mxu0 0.0
  %479 = vmatpush1.msra.mxu0 %v453
  %480 = vmatprep.subr.mxu0 0.0
  %481 = vmatpush1.msra.mxu0 %v454
  %482 = vmatprep.subr.mxu0 0.0
  %483 = vmatpush1.msra.mxu0 %v455
  %484 = vmatprep.subr.mxu0 0.0
  %485 = vmatpush1.msra.mxu0 %v456
  %486 = vmatprep.subr.mxu0 0.0
  %487 = vmatpush1.msra.mxu0 %v457
  %488 = vmatprep.subr.mxu0 0.0
  %489 = vmatpush1.msra.mxu0 %v458
  %490 = vmatprep.subr.mxu0 0.0
  %491 = vmatpush1.msra.mxu0 %v459
  %492 = vmatprep.subr.mxu0 0.0
  %493 = vmatpush1.msra.mxu0 %v460
  %494 = vmatprep.subr.mxu0 0.0
  %495 = vmatpush1.msra.mxu0 %v461
  %496 = vmatprep.subr.mxu0 0.0
  %497 = vmatpush1.msra.mxu0 %v462
  %498 = vmatprep.subr.mxu0 0.0
  %499 = vmatpush1.msra.mxu0 %v463
  %500 = vmatprep.subr.mxu0 0.0
  %501 = vmatpush1.msra.mxu0 %v464
  %502 = vmatprep.subr.mxu0 0.0
  %503 = vmatpush1.msra.mxu0 %v465
  %504 = vmatprep.subr.mxu0 0.0
  %505 = vmatpush1.msra.mxu0 %v466
  %506 = vmatprep.subr.mxu0 0.0
  %507 = vmatpush1.msra.mxu0 0.0
  %508 = vmatprep.subr.mxu0 0.0
  %509 = vmatpush1.msra.mxu0 0.0
  %510 = vmatprep.subr.mxu0 0.0
  %511 = vmatpush1.msra.mxu0 0.0
  %512 = vmatprep.subr.mxu0 0.0
  %513 = vmatpush1.msra.mxu0 0.0
  %514 = vmatprep.subr.mxu0 0.0
  %515 = vmatpush1.msra.mxu0 0.0
  %516 = vmatprep.subr.mxu0 0.0
  %517 = vmatpush1.msra.mxu0 0.0
  %518 = vmatprep.subr.mxu0 0.0
  %519 = vmatpush1.msra.mxu0 0.0
  %520 = vmatprep.subr.mxu0 0.0
  %521 = vmatpush1.msra.mxu0 0.0
  %522 = vmatprep.subr.mxu0 0.0
  %523 = vmatpush1.msra.mxu0 0.0
  %524 = vmatprep.subr.mxu0 0.0
  %525 = vmatpush1.msra.mxu0 0.0
  %526 = vmatprep.subr.mxu0 0.0
  %527 = vmatpush1.msra.mxu0 0.0
  %528 = vmatprep.subr.mxu0 0.0
  %529 = vmatpush1.msra.mxu0 0.0
  %530 = vmatprep.subr.mxu0 0.0
  %531 = vmatpush1.msra.mxu0 0.0
  %532 = vmatprep.subr.mxu0 0.0
  %533 = vmatpush1.msra.mxu0 0.0
  %534 = vmatprep.subr.mxu0 0.0
  %535 = vmatpush1.msra.mxu0 0.0
  %536 = vmatprep.subr.mxu0 0.0
  %537 = vmatpush1.msra.mxu0 0.0
  %538 = vmatprep.mubr.f32.mxu0 0.0
  %539 = vmatmul.mubr.f32.gmra.mrb[0].mxu0 %v449
  %v540 = vpop.f32.mrb[0].mxu0
  %v541 = vadd.f32 %v472, %v540
  %v542 = vpop.f32.mrb[0].mxu0
  %543 = vmatprep.mubr.f32.mxu0 0.0
  %544 = vmatmul.mubr.f32.gmra.mrb[0].mxu0 %v450
  %v545 = vpop.f32.mrb[0].mxu0
  %v546 = vadd.f32 %v472, %v545
  %v547 = vpop.f32.mrb[0].mxu0
  %548 = vdwg.mxu0
  %vm549 = vcmask 23552
  %550 = vst.msk [vmem:[%s7] sm:$0xff] %vm549, %v541
  %551 = vst.msk [vmem:[%s7 + $0x8] sm:$0xff] %vm549, %v546
  // Predicated region
  $region30: #{product_recommendation_forward.1} parent=0 // pred_check
    _
  $region31: #{product_recommendation_forward.1} parent=0 // pred_check_branch
    %553 = sbr.rel (0) target = $region33
  $region32: #{product_recommendation_forward.1} parent=0 // pred_region
    _
  $region33: #{product_recommendation_forward.1} parent=0 // pred_fallthru
    _
  // Predicated region
  $region34: #{product_recommendation_forward.1} parent=0 // pred_check
    _
  $region35: #{product_recommendation_forward.1} parent=0 // pred_check_branch
    %555 = sbr.rel (0) target = $region37
  $region36: #{product_recommendation_forward.1} parent=0 // pred_region
    _
  $region37: #{product_recommendation_forward.1} parent=0 // pred_fallthru
    _

</llo_original>
